<compile_context>
chip_gen: v6e
topology: v6e:2x2x1
jax: 0.10.0
libtpu: 0.0.40
codegen_flags: <defaults>
</compile_context>

<pallas_src>
import math
import numpy as np

import jax
import jax.numpy as jnp
from jax.experimental import pallas as pl
from jax.experimental.pallas import tpu as pltpu


def build_mask(kernel_size):
    """Causal mask identical to the PyTorch buffer construction."""
    kC, kH, kW = kernel_size
    mask = np.ones((kC, kH, kW), np.float32)
    mask[kC // 2 + 1:, :, :] = 0
    mask[kC // 2, kH // 2 + 1:, :] = 0
    mask[kC // 2, kH // 2, kW // 2:] = 0
    return mask


def _taps_by_dw(kernel_size):
    """Active (non-masked) taps bucketed by column shift dw.

    Returns {dw: [(dh, dc, flat_weight_index), ...]} with
    dc = kc - pC, dh = kh - pH, dw = kw - pW.
    """
    kC, kH, kW = kernel_size
    pC, pH, pW = kC // 2, kH // 2, kW // 2
    mask = build_mask(kernel_size)
    buckets = {}
    for kc in range(kC):
        for kh in range(kH):
            for kw in range(kW):
                if mask[kc, kh, kw] == 0.0:
                    continue
                buckets.setdefault(kw - pW, []).append(
                    (kh - pH, kc - pC, (kc * kH + kh) * kW + kw))
    return buckets


def _make_kernel(C, W, tile_h, kernel_size, buckets, Bt, base, slab_W, use_halo):
    kC, kH, kW = kernel_size
    pC, pH, pW = kC // 2, kH // 2, kW // 2
    R = pC + C                       # slab rows per folded batch
    n_rows = Bt * R - pC             # accumulator rows (channels + interleave junk)
    tile_L = tile_h * W
    f32 = jnp.float32

    def body(w_ref, x_ref, halo_ref, b_ref, o_ref, xs_ref):
        # w_ref   : SMEM (kC*kH*kW,) f32 masked weights (scalar prefetch)
        # x_ref   : VMEM (Bt, C, tile_L) core rows of this H-tile, io dtype
        # halo_ref: VMEM (Bt, 1, C, 2*pH*W) top|bottom halo rows   [use_halo]
        # b_ref   : VMEM (n_rows, 1) f32 bias expanded onto the slab row layout
        # o_ref   : VMEM (Bt, C, tile_L)
        # xs_ref  : VMEM (Bt*R, slab_W) f32 slab scratch

        # -- re-zero only the constant-pad regions (scratch persists per core
        #    across grid steps; everything else is overwritten below) --
        if pC > 0:
            for b in range(Bt):
                xs_ref[b * R:b * R + pC, :] = jnp.zeros((pC, slab_W), f32)
        if pW > 0:
            l0 = base - pH * W - pW
            r0 = base + tile_L + pH * W
            xs_ref[:, l0:l0 + pW] = jnp.zeros((Bt * R, pW), f32)
            xs_ref[:, r0:r0 + pW] = jnp.zeros((Bt * R, pW), f32)

        # -- assemble halo + core rows; io_dtype -> f32 fused into the copy --
        for b in range(Bt):
            c0 = b * R + pC
            if pH > 0:
                if use_halo:
                    top = halo_ref[b, 0, :, 0:pH * W].astype(f32)
                    bot = halo_ref[b, 0, :, pH * W:2 * pH * W].astype(f32)
                else:           # single H tile: halos are image-boundary zeros
                    top = jnp.zeros((C, pH * W), f32)
                    bot = jnp.zeros((C, pH * W), f32)
                xs_ref[c0:c0 + C, base - pH * W:base] = top
                xs_ref[c0:c0 + C, base + tile_L:base + tile_L + pH * W] = bot
            xs_ref[c0:c0 + C, base:base + tile_L] = x_ref[b].astype(f32)

        # -- column masks: lane shifts crossing an image-row boundary must
        #    contribute zero (the conv's zero padding along W) --
        wmask = {}
        if any(dw != 0 for dw in buckets):
            wcol = jax.lax.broadcasted_iota(jnp.int32, (1, tile_L), 1) % W
            for dw in buckets:
                if dw != 0:
                    ok = jnp.logical_and(wcol + dw >= 0, wcol + dw < W)
                    wmask[dw] = ok.astype(f32)

        # -- accumulate: per-dw bucket partials, mask applied once per bucket.
        #    acc starts as the broadcast bias (saves a full add pass). --
        acc = jnp.broadcast_to(b_ref[...], (n_rows, tile_L))
        for dw in sorted(buckets):
            partial = None
            for (dh, dc, widx) in buckets[dw]:
                s = dh * W + dw
                view = xs_ref[pC + dc:pC + dc + n_rows,
                              base + s:base + s + tile_L]      # fresh VMEM load
                term = w_ref[widx] * view
                partial = term if partial is None else partial + term
            if dw != 0:
                partial = partial * wmask[dw]
            acc = acc + partial

        # -- store output channels (interleave junk rows are skipped) --
        for b in range(Bt):
            o_ref[b] = acc[b * R:b * R + C, :].astype(o_ref.dtype)

    if use_halo:
        def kernel(w_ref, x_ref, halo_ref, b_ref, o_ref, xs_ref):
            body(w_ref, x_ref, halo_ref, b_ref, o_ref, xs_ref)
    else:
        def kernel(w_ref, x_ref, b_ref, o_ref, xs_ref):
            body(w_ref, x_ref, None, b_ref, o_ref, xs_ref)
    return kernel


def masked_conv3d(inputs, weight, bias, kernel_size, stride=(1, 1, 1),
                  padding=None, tile_h=None, batch_tile=None):
    """Pallas forward of MaskedConv3d.

    inputs : (B, C, H, W)
    weight : (kC, kH, kW)  (the (1,1,...) dims of the torch parameter squeezed)
    bias   : (C,)
    """
    B, C, H, W = inputs.shape
    kC, kH, kW = kernel_size
    pC, pH, pW = kC // 2, kH // 2, kW // 2
    if padding is None:
        padding = (pC, pH, pW)
    assert tuple(stride) == (1, 1, 1)
    assert tuple(padding) == (pC, pH, pW)

    io_dtype = inputs.dtype
    itemsize = jnp.dtype(io_dtype).itemsize
    L = H * W
    R = pC + C

    # ---- batch fold: fill >= 8 f32 sublanes when C (+pC) is small ----
    if batch_tile is None:
        bt_target = min(B, max(1, -(-8 // R)))           # ceil(8 / R)
        divisors = [d for d in range(1, B + 1) if B % d == 0]
        geq = [d for d in divisors if d >= bt_target]
        batch_tile = min(geq) if geq else max(divisors)
    Bt = int(batch_tile)
    assert 1 <= Bt <= B and B % Bt == 0
    n_bt = B // Bt
    n_rows = Bt * R - pC

    # ---- H tile from a VMEM byte budget, lane-dense unless single tile ----
    if tile_h is None:
        blk_budget = (2 << 20) // max(1, itemsize * Bt * C)
        slab_budget = (8 << 20) // max(1, 4 * Bt * R)
        tile_h = max(1, min(H, min(blk_budget, slab_budget) // W))
    tile_h = int(min(tile_h, H))

    def _ok(t):
        if H % t != 0:
            return False
        if pH > 0 and t < pH:
            return False
        return ((t * W) % 128 == 0) or (t == H)

    while tile_h > 1 and not _ok(tile_h):
        tile_h -= 1
    if not _ok(tile_h):
        tile_h = H
    n_ht = H // tile_h
    tile_L = tile_h * W
    use_halo = (pH > 0) and (n_ht > 1)

    # ---- slab geometry: core-copy store is 128-lane aligned ----
    base = ((pH * W + pW + 127) // 128) * 128
    slab_W = base + tile_L + pH * W + pW

    x3 = inputs.reshape(B, C, L)                  # free: contiguous reshape

    args = [x3]
    in_specs = [pl.BlockSpec((Bt, C, tile_L), lambda bb, t, w: (bb, 0, t))]

    # ---- tiny per-tile halo side array (only when there is >1 H tile) ----
    if use_halo:
        xr = inputs.reshape(B, C, n_ht, tile_h, W)
        zblk = jnp.zeros((B, C, 1, pH, W), io_dtype)
        top = jnp.concatenate([zblk, xr[:, :, :n_ht - 1, tile_h - pH:, :]], axis=2)
        bot = jnp.concatenate([xr[:, :, 1:, :pH, :], zblk], axis=2)
        halo = jnp.concatenate([top, bot], axis=3)            # (B, C, n_ht, 2pH, W)
        halo = jnp.transpose(halo, (0, 2, 1, 3, 4)).reshape(B, n_ht, C, 2 * pH * W)
        args.append(halo)
        in_specs.append(
            pl.BlockSpec((Bt, 1, C, 2 * pH * W), lambda bb, t, w: (bb, t, 0, 0)))

    # ---- masked weights (scalar prefetch) + bias on the slab row layout ----
    mask = jnp.asarray(build_mask(kernel_size))
    w_flat = (jnp.asarray(weight, jnp.float32) * mask).reshape(-1)
    bias_f = jnp.asarray(bias, jnp.float32).reshape(C)
    bias_exp = jnp.zeros((Bt, R), jnp.float32).at[:, :C].set(bias_f[None, :])
    bias_exp = bias_exp.reshape(Bt * R)[:n_rows].reshape(n_rows, 1)
    args.append(bias_exp)
    in_specs.append(pl.BlockSpec((n_rows, 1), lambda bb, t, w: (0, 0)))

    buckets = _taps_by_dw(kernel_size)
    kernel = _make_kernel(C, W, tile_h, kernel_size, buckets, Bt, base, slab_W,
                          use_halo)

    # ---- VMEM estimate -> vmem_limit_bytes (keeps v7x's 64 MiB safe) ----
    blk_bytes = Bt * C * tile_L * itemsize
    halo_bytes = Bt * C * 2 * pH * W * itemsize if use_halo else 0
    slab_bytes = Bt * R * slab_W * 4
    est = 4 * blk_bytes + 2 * halo_bytes + slab_bytes + n_rows * 512 + (2 << 20)
    vmem_limit = int(min(max(est, 32 << 20), 64 << 20))

    out3 = pl.pallas_call(
        kernel,
        out_shape=jax.ShapeDtypeStruct((B, C, L), io_dtype),
        grid_spec=pltpu.PrefetchScalarGridSpec(
            num_scalar_prefetch=1,
            grid=(n_bt, n_ht),
            in_specs=in_specs,
            out_specs=pl.BlockSpec((Bt, C, tile_L), lambda bb, t, w: (bb, 0, t)),
            scratch_shapes=[pltpu.VMEM((Bt * R, slab_W), jnp.float32)],
        ),
        compiler_params=pltpu.CompilerParams(
            dimension_semantics=("parallel", "parallel"),
            vmem_limit_bytes=vmem_limit),
    )(w_flat, *args)
    return out3.reshape(B, C, H, W)


def masked_conv3d_reference(inputs, weight, bias, kernel_size):
    """Pure-JAX reference mirroring the PyTorch forward (for validation)."""
    B, C, H, W = inputs.shape
    kC, kH, kW = kernel_size
    mask = jnp.asarray(build_mask(kernel_size))
    w = (jnp.asarray(weight, jnp.float32) * mask).reshape(1, 1, kC, kH, kW)
    x5 = inputs[:, None].astype(jnp.float32)                   # (B,1,C,H,W)
    y = jax.lax.conv_general_dilated(
        x5, w, window_strides=(1, 1, 1),
        padding=[(kC // 2, kC // 2), (kH // 2, kH // 2), (kW // 2, kW // 2)],
        dimension_numbers=('NCDHW', 'OIDHW', 'NCDHW'))
    z = y[:, 0]
    return z + jnp.asarray(bias, jnp.float32).reshape(1, C, 1, 1)


if __name__ == "__main__":
    # MaskedConv3d(channels=4, kernel_size=(3,3,3), stride=1, padding=1, bias=True)
    B, C, H, W = 2, 4, 16, 16
    kernel_size = (3, 3, 3)
    kC, kH, kW = kernel_size

    key = jax.random.PRNGKey(0)
    k_w, k_b, k_x = jax.random.split(key, 3)

    bound = math.sqrt(1.0 / (kC * kH * kW))
    weight = jax.random.uniform(k_w, (kC, kH, kW), jnp.float32,
                                minval=-bound, maxval=bound)
    weight = weight * jnp.asarray(build_mask(kernel_size))   # __init__ masks weight
    bias = 0.1 * jax.random.normal(k_b, (C,), jnp.float32)
    x = jax.random.normal(k_x, (B, C, H, W), jnp.float32)

    ref = jax.block_until_ready(
        masked_conv3d_reference(x, weight, bias, kernel_size))

    # Default: batch-folded (Bt=2), single H tile (halo-free path).
    out_default = jax.block_until_ready(
        masked_conv3d(x, weight, bias, kernel_size))
    np.testing.assert_allclose(np.asarray(out_default), np.asarray(ref),
                               rtol=1e-5, atol=1e-5)

    # Multi H-tile path (halos exercised), no batch folding.
    out_tiled = jax.block_until_ready(
        masked_conv3d(x, weight, bias, kernel_size, tile_h=8, batch_tile=1))
    np.testing.assert_allclose(np.asarray(out_tiled), np.asarray(ref),
                               rtol=1e-5, atol=1e-5)

    # Multi H-tile path with halos AND batch folding.
    out_both = jax.block_until_ready(
        masked_conv3d(x, weight, bias, kernel_size, tile_h=8, batch_tile=2))
    np.testing.assert_allclose(np.asarray(out_both), np.asarray(ref),
                               rtol=1e-5, atol=1e-5)

    assert out_default.shape == (B, C, H, W)
    print("KERNEL_OK")
</pallas_src>

<mosaic_0001>
module attributes {stable_mosaic.version = 11 : i64} {
  func.func @kernel(%arg0: i32, %arg1: i32, %arg2: memref<27xf32, #tpu.memory_space<smem>>, %arg3: memref<2x4x256xf32, #tpu.memory_space<vmem>>, %arg4: memref<9x1xf32, #tpu.memory_space<vmem>>, %arg5: memref<2x4x256xf32, #tpu.memory_space<vmem>>, %arg6: memref<10x401xf32, #tpu.memory_space<vmem>>) attributes {dimension_semantics = [#tpu.dimension_semantics<parallel>, #tpu.dimension_semantics<parallel>], iteration_bounds = array<i64: 1, 1>, scalar_prefetch = 1 : i64, scratch_operands = 1 : i64, tpu.core_type = #tpu.core_type<tc>, window_params = [{transform_indices = @transform_0, window_bounds = array<i64: 2, 4, 256>}, {pipeline_mode = #tpu.pipeline_mode<synchronous>, transform_indices = @transform_1, window_bounds = array<i64: 9, 1>}, {transform_indices = @transform_2, window_bounds = array<i64: 2, 4, 256>}]} {
    %cst = arith.constant 0.000000e+00 : f32
    %0 = vector.broadcast %cst : f32 to vector<1x401xf32>
    %c0 = arith.constant 0 : index
    %c0_0 = arith.constant 0 : index
    %1 = vector.load %arg6[%c0, %c0_0] : memref<10x401xf32, #tpu.memory_space<vmem>>, vector<1x401xf32>
    tpu.vector_store %arg6[%c0, %c0_0], %0 {strides = array<i32>} : memref<10x401xf32, #tpu.memory_space<vmem>>, vector<1x401xf32>,
    %cst_1 = arith.constant 0.000000e+00 : f32
    %2 = vector.broadcast %cst_1 : f32 to vector<1x401xf32>
    %c5 = arith.constant 5 : index
    %c0_2 = arith.constant 0 : index
    %3 = vector.load %arg6[%c5, %c0_2] : memref<10x401xf32, #tpu.memory_space<vmem>>, vector<1x401xf32>
    tpu.vector_store %arg6[%c5, %c0_2], %2 {strides = array<i32>} : memref<10x401xf32, #tpu.memory_space<vmem>>, vector<1x401xf32>,
    %cst_3 = arith.constant 0.000000e+00 : f32
    %4 = vector.broadcast %cst_3 : f32 to vector<10x1xf32>
    %c0_4 = arith.constant 0 : index
    %c111 = arith.constant 111 : index
    %5 = vector.load %arg6[%c0_4, %c111] : memref<10x401xf32, #tpu.memory_space<vmem>>, vector<10x1xf32>
    tpu.vector_store %arg6[%c0_4, %c111], %4 {strides = array<i32>} : memref<10x401xf32, #tpu.memory_space<vmem>>, vector<10x1xf32>,
    %cst_5 = arith.constant 0.000000e+00 : f32
    %6 = vector.broadcast %cst_5 : f32 to vector<10x1xf32>
    %c0_6 = arith.constant 0 : index
    %c400 = arith.constant 400 : index
    %7 = vector.load %arg6[%c0_6, %c400] : memref<10x401xf32, #tpu.memory_space<vmem>>, vector<10x1xf32>
    tpu.vector_store %arg6[%c0_6, %c400], %6 {strides = array<i32>} : memref<10x401xf32, #tpu.memory_space<vmem>>, vector<10x1xf32>,
    %cst_7 = arith.constant 0.000000e+00 : f32
    %8 = vector.broadcast %cst_7 : f32 to vector<4x16xf32>
    %cst_8 = arith.constant 0.000000e+00 : f32
    %9 = vector.broadcast %cst_8 : f32 to vector<4x16xf32>
    %c1 = arith.constant 1 : index
    %c112 = arith.constant 112 : index
    %10 = vector.load %arg6[%c1, %c112] : memref<10x401xf32, #tpu.memory_space<vmem>>, vector<4x16xf32>
    tpu.vector_store %arg6[%c1, %c112], %8 {strides = array<i32>} : memref<10x401xf32, #tpu.memory_space<vmem>>, vector<4x16xf32>,
    %c1_9 = arith.constant 1 : index
    %c384 = arith.constant 384 : index
    %11 = vector.load %arg6[%c1_9, %c384] : memref<10x401xf32, #tpu.memory_space<vmem>>, vector<4x16xf32>
    tpu.vector_store %arg6[%c1_9, %c384], %9 {strides = array<i32>} : memref<10x401xf32, #tpu.memory_space<vmem>>, vector<4x16xf32>,
    %c0_10 = arith.constant 0 : index
    %c0_11 = arith.constant 0 : index
    %c0_12 = arith.constant 0 : index
    %12 = vector.load %arg3[%c0_10, %c0_11, %c0_12] : memref<2x4x256xf32, #tpu.memory_space<vmem>>, vector<1x4x256xf32>
    %13 = vector.shape_cast %12 : vector<1x4x256xf32> to vector<4x256xf32>
    %c1_13 = arith.constant 1 : index
    %c128 = arith.constant 128 : index
    %14 = vector.load %arg6[%c1_13, %c128] : memref<10x401xf32, #tpu.memory_space<vmem>>, vector<4x256xf32>
    tpu.vector_store %arg6[%c1_13, %c128], %13 {strides = array<i32>} : memref<10x401xf32, #tpu.memory_space<vmem>>, vector<4x256xf32>,
    %cst_14 = arith.constant 0.000000e+00 : f32
    %15 = vector.broadcast %cst_14 : f32 to vector<4x16xf32>
    %cst_15 = arith.constant 0.000000e+00 : f32
    %16 = vector.broadcast %cst_15 : f32 to vector<4x16xf32>
    %c6 = arith.constant 6 : index
    %c112_16 = arith.constant 112 : index
    %17 = vector.load %arg6[%c6, %c112_16] : memref<10x401xf32, #tpu.memory_space<vmem>>, vector<4x16xf32>
    tpu.vector_store %arg6[%c6, %c112_16], %15 {strides = array<i32>} : memref<10x401xf32, #tpu.memory_space<vmem>>, vector<4x16xf32>,
    %c6_17 = arith.constant 6 : index
    %c384_18 = arith.constant 384 : index
    %18 = vector.load %arg6[%c6_17, %c384_18] : memref<10x401xf32, #tpu.memory_space<vmem>>, vector<4x16xf32>
    tpu.vector_store %arg6[%c6_17, %c384_18], %16 {strides = array<i32>} : memref<10x401xf32, #tpu.memory_space<vmem>>, vector<4x16xf32>,
    %c1_19 = arith.constant 1 : index
    %c0_20 = arith.constant 0 : index
    %c0_21 = arith.constant 0 : index
    %19 = vector.load %arg3[%c1_19, %c0_20, %c0_21] : memref<2x4x256xf32, #tpu.memory_space<vmem>>, vector<1x4x256xf32>
    %20 = vector.shape_cast %19 : vector<1x4x256xf32> to vector<4x256xf32>
    %c6_22 = arith.constant 6 : index
    %c128_23 = arith.constant 128 : index
    %21 = vector.load %arg6[%c6_22, %c128_23] : memref<10x401xf32, #tpu.memory_space<vmem>>, vector<4x256xf32>
    tpu.vector_store %arg6[%c6_22, %c128_23], %20 {strides = array<i32>} : memref<10x401xf32, #tpu.memory_space<vmem>>, vector<4x256xf32>,
    %22 = tpu.iota {dimensions = array<i32: 1>} : vector<1x256xi32>
    %c16_i32 = arith.constant 16 : i32
    %c0_i32 = arith.constant 0 : i32
    %23 = arith.cmpi eq, %c16_i32, %c0_i32 : i32
    %c1_i32 = arith.constant 1 : i32
    %24 = arith.select %23, %c1_i32, %c16_i32 : i32
    %25 = vector.broadcast %24 : i32 to vector<1x256xi32>
    %26 = arith.remsi %22, %25 : vector<1x256xi32>
    %c0_i32_24 = arith.constant 0 : i32
    %27 = vector.broadcast %c0_i32_24 : i32 to vector<1x256xi32>
    %28 = arith.cmpi ne, %26, %27 : vector<1x256xi32>
    %c0_i32_25 = arith.constant 0 : i32
    %29 = vector.broadcast %c0_i32_25 : i32 to vector<1x256xi32>
    %30 = arith.cmpi slt, %26, %29 : vector<1x256xi32>
    %c0_i32_26 = arith.constant 0 : i32
    %31 = arith.cmpi slt, %24, %c0_i32_26 : i32
    %32 = vector.broadcast %31 : i1 to vector<1x256xi1>
    %33 = vector.broadcast %32 : vector<1x256xi1> to vector<1x256xi1>
    %34 = arith.xori %30, %33 : vector<1x256xi1>
    %35 = arith.andi %34, %28 : vector<1x256xi1>
    %36 = vector.broadcast %24 : i32 to vector<1x256xi32>
    %37 = arith.addi %26, %36 : vector<1x256xi32>
    %38 = arith.select %35, %37, %26 : vector<1x256xi1>, vector<1x256xi32>
    %c-1_i32 = arith.constant -1 : i32
    %39 = vector.broadcast %c-1_i32 : i32 to vector<1x256xi32>
    %40 = arith.addi %38, %39 : vector<1x256xi32>
    %c0_i32_27 = arith.constant 0 : i32
    %41 = vector.broadcast %c0_i32_27 : i32 to vector<1x256xi32>
    %42 = arith.cmpi sge, %40, %41 : vector<1x256xi32>
    %c-1_i32_28 = arith.constant -1 : i32
    %43 = vector.broadcast %c-1_i32_28 : i32 to vector<1x256xi32>
    %44 = arith.addi %38, %43 : vector<1x256xi32>
    %c16_i32_29 = arith.constant 16 : i32
    %45 = vector.broadcast %c16_i32_29 : i32 to vector<1x256xi32>
    %46 = arith.cmpi slt, %44, %45 : vector<1x256xi32>
    %47 = arith.andi %42, %46 : vector<1x256xi1>
    %48 = arith.extui %47 : vector<1x256xi1> to vector<1x256xi32>
    %49 = arith.sitofp %48 : vector<1x256xi32> to vector<1x256xf32>
    %c1_i32_30 = arith.constant 1 : i32
    %50 = vector.broadcast %c1_i32_30 : i32 to vector<1x256xi32>
    %51 = arith.addi %38, %50 : vector<1x256xi32>
    %c0_i32_31 = arith.constant 0 : i32
    %52 = vector.broadcast %c0_i32_31 : i32 to vector<1x256xi32>
    %53 = arith.cmpi sge, %51, %52 : vector<1x256xi32>
    %c1_i32_32 = arith.constant 1 : i32
    %54 = vector.broadcast %c1_i32_32 : i32 to vector<1x256xi32>
    %55 = arith.addi %38, %54 : vector<1x256xi32>
    %c16_i32_33 = arith.constant 16 : i32
    %56 = vector.broadcast %c16_i32_33 : i32 to vector<1x256xi32>
    %57 = arith.cmpi slt, %55, %56 : vector<1x256xi32>
    %58 = arith.andi %53, %57 : vector<1x256xi1>
    %59 = arith.extui %58 : vector<1x256xi1> to vector<1x256xi32>
    %60 = arith.sitofp %59 : vector<1x256xi32> to vector<1x256xf32>
    %c0_34 = arith.constant 0 : index
    %c0_35 = arith.constant 0 : index
    %61 = vector.load %arg4[%c0_34, %c0_35] : memref<9x1xf32, #tpu.memory_space<vmem>>, vector<9x1xf32>
    %62 = vector.shape_cast %61 : vector<9x1xf32> to vector<9x1xf32>
    %63 = vector.broadcast %62 : vector<9x1xf32> to vector<9x256xf32>
    %c0_36 = arith.constant 0 : index
    %c111_37 = arith.constant 111 : index
    %64 = vector.load %arg6[%c0_36, %c111_37] : memref<10x401xf32, #tpu.memory_space<vmem>>, vector<9x256xf32>
    %c0_38 = arith.constant 0 : index
    %65 = memref.load %arg2[%c0_38] : memref<27xf32, #tpu.memory_space<smem>>
    %66 = vector.broadcast %65 : f32 to vector<9x256xf32>
    %67 = arith.mulf %66, %64 : vector<9x256xf32>
    %c0_39 = arith.constant 0 : index
    %c127 = arith.constant 127 : index
    %68 = vector.load %arg6[%c0_39, %c127] : memref<10x401xf32, #tpu.memory_space<vmem>>, vector<9x256xf32>
    %c3 = arith.constant 3 : index
    %69 = memref.load %arg2[%c3] : memref<27xf32, #tpu.memory_space<smem>>
    %70 = vector.broadcast %69 : f32 to vector<9x256xf32>
    %71 = arith.mulf %70, %68 : vector<9x256xf32>
    %72 = arith.addf %67, %71 : vector<9x256xf32>
    %c0_40 = arith.constant 0 : index
    %c143 = arith.constant 143 : index
    %73 = vector.load %arg6[%c0_40, %c143] : memref<10x401xf32, #tpu.memory_space<vmem>>, vector<9x256xf32>
    %c6_41 = arith.constant 6 : index
    %74 = memref.load %arg2[%c6_41] : memref<27xf32, #tpu.memory_space<smem>>
    %75 = vector.broadcast %74 : f32 to vector<9x256xf32>
    %76 = arith.mulf %75, %73 : vector<9x256xf32>
    %77 = arith.addf %72, %76 : vector<9x256xf32>
    %c1_42 = arith.constant 1 : index
    %c111_43 = arith.constant 111 : index
    %78 = vector.load %arg6[%c1_42, %c111_43] : memref<10x401xf32, #tpu.memory_space<vmem>>, vector<9x256xf32>
    %c9 = arith.constant 9 : index
    %79 = memref.load %arg2[%c9] : memref<27xf32, #tpu.memory_space<smem>>
    %80 = vector.broadcast %79 : f32 to vector<9x256xf32>
    %81 = arith.mulf %80, %78 : vector<9x256xf32>
    %82 = arith.addf %77, %81 : vector<9x256xf32>
    %c1_44 = arith.constant 1 : index
    %c127_45 = arith.constant 127 : index
    %83 = vector.load %arg6[%c1_44, %c127_45] : memref<10x401xf32, #tpu.memory_space<vmem>>, vector<9x256xf32>
    %c12 = arith.constant 12 : index
    %84 = memref.load %arg2[%c12] : memref<27xf32, #tpu.memory_space<smem>>
    %85 = vector.broadcast %84 : f32 to vector<9x256xf32>
    %86 = arith.mulf %85, %83 : vector<9x256xf32>
    %87 = arith.addf %82, %86 : vector<9x256xf32>
    %88 = vector.broadcast %49 : vector<1x256xf32> to vector<9x256xf32>
    %89 = arith.mulf %87, %88 : vector<9x256xf32>
    %90 = arith.addf %63, %89 : vector<9x256xf32>
    %c0_46 = arith.constant 0 : index
    %c112_47 = arith.constant 112 : index
    %91 = vector.load %arg6[%c0_46, %c112_47] : memref<10x401xf32, #tpu.memory_space<vmem>>, vector<9x256xf32>
    %c1_48 = arith.constant 1 : index
    %92 = memref.load %arg2[%c1_48] : memref<27xf32, #tpu.memory_space<smem>>
    %93 = vector.broadcast %92 : f32 to vector<9x256xf32>
    %94 = arith.mulf %93, %91 : vector<9x256xf32>
    %c0_49 = arith.constant 0 : index
    %c128_50 = arith.constant 128 : index
    %95 = vector.load %arg6[%c0_49, %c128_50] : memref<10x401xf32, #tpu.memory_space<vmem>>, vector<9x256xf32>
    %c4 = arith.constant 4 : index
    %96 = memref.load %arg2[%c4] : memref<27xf32, #tpu.memory_space<smem>>
    %97 = vector.broadcast %96 : f32 to vector<9x256xf32>
    %98 = arith.mulf %97, %95 : vector<9x256xf32>
    %99 = arith.addf %94, %98 : vector<9x256xf32>
    %c0_51 = arith.constant 0 : index
    %c144 = arith.constant 144 : index
    %100 = vector.load %arg6[%c0_51, %c144] : memref<10x401xf32, #tpu.memory_space<vmem>>, vector<9x256xf32>
    %c7 = arith.constant 7 : index
    %101 = memref.load %arg2[%c7] : memref<27xf32, #tpu.memory_space<smem>>
    %102 = vector.broadcast %101 : f32 to vector<9x256xf32>
    %103 = arith.mulf %102, %100 : vector<9x256xf32>
    %104 = arith.addf %99, %103 : vector<9x256xf32>
    %c1_52 = arith.constant 1 : index
    %c112_53 = arith.constant 112 : index
    %105 = vector.load %arg6[%c1_52, %c112_53] : memref<10x401xf32, #tpu.memory_space<vmem>>, vector<9x256xf32>
    %c10 = arith.constant 10 : index
    %106 = memref.load %arg2[%c10] : memref<27xf32, #tpu.memory_space<smem>>
    %107 = vector.broadcast %106 : f32 to vector<9x256xf32>
    %108 = arith.mulf %107, %105 : vector<9x256xf32>
    %109 = arith.addf %104, %108 : vector<9x256xf32>
    %110 = arith.addf %90, %109 : vector<9x256xf32>
    %c0_54 = arith.constant 0 : index
    %c113 = arith.constant 113 : index
    %111 = vector.load %arg6[%c0_54, %c113] : memref<10x401xf32, #tpu.memory_space<vmem>>, vector<9x256xf32>
    %c2 = arith.constant 2 : index
    %112 = memref.load %arg2[%c2] : memref<27xf32, #tpu.memory_space<smem>>
    %113 = vector.broadcast %112 : f32 to vector<9x256xf32>
    %114 = arith.mulf %113, %111 : vector<9x256xf32>
    %c0_55 = arith.constant 0 : index
    %c129 = arith.constant 129 : index
    %115 = vector.load %arg6[%c0_55, %c129] : memref<10x401xf32, #tpu.memory_space<vmem>>, vector<9x256xf32>
    %c5_56 = arith.constant 5 : index
    %116 = memref.load %arg2[%c5_56] : memref<27xf32, #tpu.memory_space<smem>>
    %117 = vector.broadcast %116 : f32 to vector<9x256xf32>
    %118 = arith.mulf %117, %115 : vector<9x256xf32>
    %119 = arith.addf %114, %118 : vector<9x256xf32>
    %c0_57 = arith.constant 0 : index
    %c145 = arith.constant 145 : index
    %120 = vector.load %arg6[%c0_57, %c145] : memref<10x401xf32, #tpu.memory_space<vmem>>, vector<9x256xf32>
    %c8 = arith.constant 8 : index
    %121 = memref.load %arg2[%c8] : memref<27xf32, #tpu.memory_space<smem>>
    %122 = vector.broadcast %121 : f32 to vector<9x256xf32>
    %123 = arith.mulf %122, %120 : vector<9x256xf32>
    %124 = arith.addf %119, %123 : vector<9x256xf32>
    %c1_58 = arith.constant 1 : index
    %c113_59 = arith.constant 113 : index
    %125 = vector.load %arg6[%c1_58, %c113_59] : memref<10x401xf32, #tpu.memory_space<vmem>>, vector<9x256xf32>
    %c11 = arith.constant 11 : index
    %126 = memref.load %arg2[%c11] : memref<27xf32, #tpu.memory_space<smem>>
    %127 = vector.broadcast %126 : f32 to vector<9x256xf32>
    %128 = arith.mulf %127, %125 : vector<9x256xf32>
    %129 = arith.addf %124, %128 : vector<9x256xf32>
    %130 = vector.broadcast %60 : vector<1x256xf32> to vector<9x256xf32>
    %131 = arith.mulf %129, %130 : vector<9x256xf32>
    %132 = arith.addf %110, %131 : vector<9x256xf32>
    %133 = vector.extract_strided_slice %132 {offsets = [0, 0], sizes = [4, 256], strides = [1, 1]} : vector<9x256xf32> to vector<4x256xf32>
    %c0_60 = arith.constant 0 : index
    %c0_61 = arith.constant 0 : index
    %c0_62 = arith.constant 0 : index
    %134 = vector.load %arg5[%c0_60, %c0_61, %c0_62] : memref<2x4x256xf32, #tpu.memory_space<vmem>>, vector<1x4x256xf32>
    %135 = vector.shape_cast %134 : vector<1x4x256xf32> to vector<4x256xf32>
    %136 = vector.shape_cast %133 : vector<4x256xf32> to vector<1x4x256xf32>
    tpu.vector_store %arg5[%c0_60, %c0_61, %c0_62], %136 {strides = array<i32>} : memref<2x4x256xf32, #tpu.memory_space<vmem>>, vector<1x4x256xf32>,
    %137 = vector.extract_strided_slice %132 {offsets = [5, 0], sizes = [4, 256], strides = [1, 1]} : vector<9x256xf32> to vector<4x256xf32>
    %c1_63 = arith.constant 1 : index
    %c0_64 = arith.constant 0 : index
    %c0_65 = arith.constant 0 : index
    %138 = vector.load %arg5[%c1_63, %c0_64, %c0_65] : memref<2x4x256xf32, #tpu.memory_space<vmem>>, vector<1x4x256xf32>
    %139 = vector.shape_cast %138 : vector<1x4x256xf32> to vector<4x256xf32>
    %140 = vector.shape_cast %137 : vector<4x256xf32> to vector<1x4x256xf32>
    tpu.vector_store %arg5[%c1_63, %c0_64, %c0_65], %140 {strides = array<i32>} : memref<2x4x256xf32, #tpu.memory_space<vmem>>, vector<1x4x256xf32>,
    return
  }
  func.func @transform_0(%arg0: i32, %arg1: i32, %arg2: memref<27xf32, #tpu.memory_space<smem>>) -> (i32, i32, i32) {
    %c0_i32 = arith.constant 0 : i32
    %c0_i32_0 = arith.constant 0 : i32
    return %arg0, %c0_i32, %arg1 : i32, i32, i32
  }
  func.func @transform_1(%arg0: i32, %arg1: i32, %arg2: memref<27xf32, #tpu.memory_space<smem>>) -> (i32, i32) {
    %c0_i32 = arith.constant 0 : i32
    %c0_i32_0 = arith.constant 0 : i32
    %c0_i32_1 = arith.constant 0 : i32
    return %c0_i32, %c0_i32_0 : i32, i32
  }
  func.func @transform_2(%arg0: i32, %arg1: i32, %arg2: memref<27xf32, #tpu.memory_space<smem>>) -> (i32, i32, i32) {
    %c0_i32 = arith.constant 0 : i32
    %c0_i32_0 = arith.constant 0 : i32
    return %arg0, %c0_i32, %arg1 : i32, i32, i32
  }
}

</mosaic_0001>

<llo_original>
// kernel: tpu_custom_call.1
$region0: #{tpu_custom_call.1}
  #allocation0 [shape = 'u32[]', space=smem, size = 0x4, offset = 0x4, fixed_abs, tag = 'smem constant byte address 0x4 - core index']
  #allocation1 [shape = 'u32[144,128]{1,0:T(1,128)}', space=vmem, size = 0x12000, scoped, tag = 'internal scratch']
  #allocation2 [shape = 'f32[10,401]{1,0:T(8,128)}', space=vmem, size = 0x8000, scoped, tag = 'scratch operand']
  #allocation3 [shape = 's32[1]{0}', space=sflag, size = 0x4, scoped, tag = 'scoped memory for tpu_custom_call.1']
  #allocation4 [shape = 'u8[512]{0}', space=smem, size = 0x200, scoped, tag = 'prefetched SMEM operand 0']
  %s0 = inlined_call_operand.vmem [shape: f32[27], index: 0, kind: input, shape index: {}]
  %s1 = inlined_call_operand.vmem [shape: f32[2,4,256], index: 1, kind: input, shape index: {}]
  %s2 = inlined_call_operand.vmem [shape: f32[9,1], index: 2, kind: input, shape index: {}]
  %s3 = inlined_call_operand.hbm [shape: f32[2,4,256], index: 3, kind: output, shape index: {}]
  %s4 = sld [smem:[#allocation0]]
  $region18: #{tpu_custom_call.1} parent=0
    _
  %s6 = ssub.s32 1, %s4
  %s7 = scalar_select 0, %s6, %s4
  %s8 = sshll.u32 %s0, 4
  %s9 = int_to_ptr.vmem [resolvable:$true] %s8
  %11 = dma.vmem_to_smem %s9, 16, [#allocation4], [#allocation3]
  %12 = dma.done [#allocation3], 16
  %13 = sfence
  $region1: #{tpu_custom_call.1} parent=0
    #allocation5 [shape = 'u8[8192]{0}', space=vmem, size = 0x2000, scoped, tag = 'output window, operand 0, single buffered']
    #allocation6 [shape = 's32[1]{0}', space=sflag, size = 0x4, scoped, tag = 'scoped memory for tpu_custom_call.1']
    %14 = vsyncpa [#allocation6], 0
    // Predicated region
    $region2: #{tpu_custom_call.1} parent=1 // pred_check
      _
    $region3: #{tpu_custom_call.1} parent=1 // pred_check_branch
      %16 = sbr.rel (0) target = $region5
    $region4: #{tpu_custom_call.1} parent=1 // pred_region
      _
    $region5: #{tpu_custom_call.1} parent=1 // pred_fallthru
      _
    // Predicated region
    $region6: #{tpu_custom_call.1} parent=1 // pred_check
      _
    $region7: #{tpu_custom_call.1} parent=1 // pred_check_branch
      %18 = sbr.rel (0) target = $region9
    $region8: #{tpu_custom_call.1} parent=1 // pred_region
      _
    $region9: #{tpu_custom_call.1} parent=1 // pred_fallthru
      _
    %v19 = vlaneseq
    %vm20 = vcmp.ge.s32.totalorder %v19, 0
    %vm21 = vcmp.lt.s32.totalorder %v19, 401
    %vm22 = vmand %vm20, %vm21
    %23 = vst.msk [vmem:[#allocation2] ss:$8 sm:$0xf] %vm22, 0.0
    %24 = vst.msk [vmem:[#allocation2] ss:$8 sm:$0x0] %vm22, 0.0
    %s25 = scalar_lea.vmem [#allocation2], 5
    %26 = vst.msk [vmem:[%s25] ss:$8 sm:$0xf] %vm22, 0.0
    %27 = vst.msk [vmem:[%s25] ss:$8 sm:$0x0] %vm22, 0.0
    %vm28 = vcmask 917368
    %29 = vst.msk [vmem:[#allocation2] sm:$0xff] %vm28, 0.0
    %vm30 = vcmask 911224
    %31 = vst.msk [vmem:[#allocation2 + $0x20] sm:$0x3] %vm30, 0.0
    %vm32 = vcmask 138368
    %33 = vst.msk [vmem:[#allocation2 + $0x18] sm:$0xff] %vm32, 0.0
    %vm34 = vcmask 132224
    %35 = vst.msk [vmem:[#allocation2 + $0x38] sm:$0x3] %vm34, 0.0
    %vm36 = vcmask 1045377
    %37 = vst.msk [vmem:[#allocation2] sm:$0x1e] %vm36, 0.0
    %vm38 = vcmask 126977
    %39 = vst.msk [vmem:[#allocation2 + $0x18] sm:$0x1e] %vm38, 0.0
    %v40 = vld [vmem:[%s1] sm:$0xff]
    %v42 = vcombine.high %v40, %v40
    %v43 = vrot.slane %v40, 7
    %v44 = vrot.slane %v42, 7
    %47 = vst [vmem:[#allocation2 + $0x8] sm:$0x1e] %v43
    %48 = vst [vmem:[#allocation2 + $0x10] sm:$0x1e] %v44
    %vm49 = vcmask 1048454
    %50 = vst.msk [vmem:[#allocation2] sm:$0xc0] %vm49, 0.0
    %vm51 = vcmask 1042304
    %52 = vst.msk [vmem:[#allocation2 + $0x20] sm:$0x3] %vm51, 0.0
    %vm53 = vcmask 130054
    %54 = vst.msk [vmem:[#allocation2 + $0x18] sm:$0xc0] %vm53, 0.0
    %vm55 = vcmask 123904
    %56 = vst.msk [vmem:[#allocation2 + $0x38] sm:$0x3] %vm55, 0.0
    %s57 = scalar_lea.vmem %s1, 8
    %v58 = vld [vmem:[%s57] sm:$0xff]
    %v60 = vcombine.high %v58, %v58
    %v61 = vrot.slane %v58, 2
    %v62 = vrot.slane %v60, 2
    %65 = vst [vmem:[#allocation2 + $0x8] sm:$0xc0] %v61
    %66 = vst [vmem:[#allocation2 + $0x10] sm:$0xc0] %v62
    %67 = vst [vmem:[#allocation2 + $0x28] sm:$0x3] %v61
    %68 = vst [vmem:[#allocation2 + $0x30] sm:$0x3] %v62
    %v69 = vlaneseq
    %v70 = vand.u32 %v69, 127
    %v71 = vadd.s32 %v70, 128
    %vm72 = vcmp.lt.s32.totalorder %v70, 0
    %v73 = vsub.s32 0, %v70
    %v74 = vsel %vm72, %v73, %v70
    %v75 = vshrl.u32 %v74, 4
    %v76 = vand.u32 %v74, 15
    %v77 = vsub.s32 0, %v76
    %v78 = vsel %vm72, %v77, %v76
    %vm79 = vcmp.lt.s32.totalorder %v71, 0
    %v80 = vsub.s32 0, %v71
    %v81 = vsel %vm79, %v80, %v71
    %v82 = vshrl.u32 %v81, 4
    %v83 = vand.u32 %v81, 15
    %v84 = vsub.s32 0, %v83
    %v85 = vsel %vm79, %v84, %v83
    %vm86 = vcmp.ne.s32.totalorder %v78, 0
    %vm87 = vcmp.ne.s32.totalorder %v85, 0
    %vm88 = vcmp.lt.s32.totalorder %v78, 0
    %vm89 = vcmp.lt.s32.totalorder %v85, 0
    %vm90 = vmand %vm88, %vm86
    %vm91 = vmand %vm89, %vm87
    %v92 = vadd.s32 %v78, 16
    %v93 = vadd.s32 %v85, 16
    %v94 = vsel %vm90, %v92, %v78
    %v95 = vsel %vm91, %v93, %v85
    %v96 = vadd.s32 %v94, 4294967295
    %v97 = vadd.s32 %v95, 4294967295
    %vm98 = vcmp.ge.s32.totalorder %v96, 0
    %vm99 = vcmp.ge.s32.totalorder %v97, 0
    %vm100 = vcmp.lt.s32.totalorder %v96, 16
    %vm101 = vcmp.lt.s32.totalorder %v97, 16
    %vm102 = vmand %vm98, %vm100
    %vm103 = vmand %vm99, %vm101
    %v104 = vsel %vm102, 1, 0
    %v105 = vsel %vm103, 1, 0
    %v106 = vcvt.s32.f32 %v104
    %v107 = vcvt.s32.f32 %v105
    %v108 = vadd.s32 %v94, 1
    %v109 = vadd.s32 %v95, 1
    %vm110 = vcmp.ge.s32.totalorder %v108, 0
    %vm111 = vcmp.ge.s32.totalorder %v109, 0
    %vm112 = vcmp.lt.s32.totalorder %v108, 16
    %vm113 = vcmp.lt.s32.totalorder %v109, 16
    %vm114 = vmand %vm110, %vm112
    %vm115 = vmand %vm111, %vm113
    %v116 = vsel %vm114, 1, 0
    %v117 = vsel %vm115, 1, 0
    %v118 = vcvt.s32.f32 %v116
    %v119 = vcvt.s32.f32 %v117
    %v120 = vld [vmem:[%s2] sm:$0xff]
    %v121 = vld [vmem:[%s2 + $0x8] sm:$0x1]
    %123 = vset.pattern.permute.xlu0 0
    %124 = vperm.xlu0 %123, %v120
    %v125 = vpop.permute.xlu0 %124
    %128 = vset.pattern.permute.xlu0 0
    %129 = vperm.xlu0 %128, %v121
    %v130 = vpop.permute.xlu0 %129
    %v132 = vld [vmem:[#allocation2] sm:$0xff]
    %v133 = vld [vmem:[#allocation2 + $0x8] sm:$0xff]
    %v134 = vld [vmem:[#allocation2 + $0x10] sm:$0xff]
    %v135 = vld [vmem:[#allocation2 + $0x20] sm:$0x1]
    %v136 = vld [vmem:[#allocation2 + $0x28] sm:$0x1]
    %v137 = vld [vmem:[#allocation2 + $0x30] sm:$0x1]
    %s138 = sld [smem:[#allocation4]]
    %v139 = vstv %s138
    %v140 = vmul.f32 %v139, %v132
    %v141 = vmul.f32 %v139, %v133
    %v142 = vmul.f32 %v139, %v134
    %v143 = vmul.f32 %v139, %v135
    %v144 = vmul.f32 %v139, %v136
    %v145 = vmul.f32 %v139, %v137
    %s146 = sld [smem:[#allocation4 + $0x3]]
    %v147 = vstv %s146
    %v148 = vmul.f32 %v147, %v132
    %v149 = vmul.f32 %v147, %v133
    %v150 = vmul.f32 %v147, %v134
    %v151 = vmul.f32 %v147, %v135
    %v152 = vmul.f32 %v147, %v136
    %v153 = vmul.f32 %v147, %v137
    %160 = vrot.lane.b32.xlu0 %v148, 112
    %v161 = vpop.permute.xlu0 %160
    %162 = vrot.lane.b32.xlu0 %v149, 112
    %v163 = vpop.permute.xlu0 %162
    %164 = vrot.lane.b32.xlu0 %v150, 112
    %v165 = vpop.permute.xlu0 %164
    %166 = vrot.lane.b32.xlu0 %v151, 112
    %v167 = vpop.permute.xlu0 %166
    %168 = vrot.lane.b32.xlu0 %v152, 112
    %v169 = vpop.permute.xlu0 %168
    %170 = vrot.lane.b32.xlu0 %v153, 112
    %v171 = vpop.permute.xlu0 %170
    %vm172 = vcmask 916480
    %v173 = vsel %vm172, %v161, %v163
    %v174 = vsel %vm172, %v163, %v165
    %v175 = vsel %vm172, %v167, %v169
    %v176 = vsel %vm172, %v169, %v171
    %v183 = vadd.f32 %v140, %v173
    %v184 = vadd.f32 %v141, %v174
    %v185 = vadd.f32 %v142, %v165
    %v186 = vadd.f32 %v143, %v175
    %v187 = vadd.f32 %v144, %v176
    %v188 = vadd.f32 %v145, %v171
    %v189 = vld [vmem:[#allocation2 + $0x8] sm:$0xff]
    %v190 = vld [vmem:[#allocation2 + $0x10] sm:$0xff]
    %v191 = vld [vmem:[#allocation2 + $0x18] sm:$0xff]
    %v192 = vld [vmem:[#allocation2 + $0x28] sm:$0x1]
    %v193 = vld [vmem:[#allocation2 + $0x30] sm:$0x1]
    %v194 = vld [vmem:[#allocation2 + $0x38] sm:$0x1]
    %s195 = sld [smem:[#allocation4 + $0x6]]
    %v196 = vstv %s195
    %v197 = vmul.f32 %v196, %v189
    %v198 = vmul.f32 %v196, %v190
    %v199 = vmul.f32 %v196, %v191
    %v200 = vmul.f32 %v196, %v192
    %v201 = vmul.f32 %v196, %v193
    %v202 = vmul.f32 %v196, %v194
    %209 = vrot.lane.b32.xlu0 %v197, 96
    %v210 = vpop.permute.xlu0 %209
    %211 = vrot.lane.b32.xlu0 %v198, 96
    %v212 = vpop.permute.xlu0 %211
    %213 = vrot.lane.b32.xlu0 %v199, 96
    %v214 = vpop.permute.xlu0 %213
    %215 = vrot.lane.b32.xlu0 %v200, 96
    %v216 = vpop.permute.xlu0 %215
    %217 = vrot.lane.b32.xlu0 %v201, 96
    %v218 = vpop.permute.xlu0 %217
    %219 = vrot.lane.b32.xlu0 %v202, 96
    %v220 = vpop.permute.xlu0 %219
    %vm221 = vcmask 785408
    %v222 = vsel %vm221, %v210, %v212
    %v223 = vsel %vm221, %v212, %v214
    %v224 = vsel %vm221, %v216, %v218
    %v225 = vsel %vm221, %v218, %v220
    %v232 = vadd.f32 %v183, %v210
    %v233 = vadd.f32 %v184, %v222
    %v234 = vadd.f32 %v185, %v223
    %v235 = vadd.f32 %v186, %v216
    %v236 = vadd.f32 %v187, %v224
    %v237 = vadd.f32 %v188, %v225
    %v238 = vld [vmem:[#allocation2] sm:$0xfe]
    %v239 = vld [vmem:[#allocation2 + $0x8] sm:$0xfe]
    %v240 = vld [vmem:[#allocation2 + $0x10] sm:$0xfe]
    %v241 = vld [vmem:[#allocation2 + $0x20] sm:$0x3]
    %v242 = vld [vmem:[#allocation2 + $0x28] sm:$0x3]
    %v243 = vld [vmem:[#allocation2 + $0x30] sm:$0x3]
    %s244 = sld [smem:[#allocation4 + $0x9]]
    %v245 = vstv %s244
    %v246 = vmul.f32 %v245, %v238
    %v247 = vmul.f32 %v245, %v239
    %v248 = vmul.f32 %v245, %v240
    %v249 = vmul.f32 %v245, %v241
    %v250 = vmul.f32 %v245, %v242
    %v251 = vmul.f32 %v245, %v243
    %vm258 = vcmask 1046528
    %v259 = vrot.slane %v246, 1
    %v260 = vrot.slane %v249, 1
    %v261 = vsel %vm258, %v259, %v260
    %v262 = vrot.slane %v247, 1
    %v263 = vrot.slane %v250, 1
    %v264 = vsel %vm258, %v262, %v263
    %v265 = vrot.slane %v248, 1
    %v266 = vrot.slane %v251, 1
    %v267 = vsel %vm258, %v265, %v266
    %v274 = vadd.f32 %v232, %v261
    %v275 = vadd.f32 %v233, %v264
    %v276 = vadd.f32 %v234, %v267
    %v277 = vadd.f32 %v235, %v260
    %v278 = vadd.f32 %v236, %v263
    %v279 = vadd.f32 %v237, %v266
    %s280 = sld [smem:[#allocation4 + $0xc]]
    %v281 = vstv %s280
    %v282 = vmul.f32 %v281, %v238
    %v283 = vmul.f32 %v281, %v239
    %v284 = vmul.f32 %v281, %v240
    %v285 = vmul.f32 %v281, %v241
    %v286 = vmul.f32 %v281, %v242
    %v287 = vmul.f32 %v281, %v243
    %v294 = vrot.slane %v282, 1
    %v295 = vrot.slane %v285, 1
    %v296 = vsel %vm258, %v294, %v295
    %v297 = vrot.slane %v283, 1
    %v298 = vrot.slane %v286, 1
    %v299 = vsel %vm258, %v297, %v298
    %v300 = vrot.slane %v284, 1
    %v301 = vrot.slane %v287, 1
    %v302 = vsel %vm258, %v300, %v301
    %303 = vrot.lane.b32.xlu0 %v296, 112
    %v304 = vpop.permute.xlu0 %303
    %305 = vrot.lane.b32.xlu0 %v299, 112
    %v306 = vpop.permute.xlu0 %305
    %307 = vrot.lane.b32.xlu0 %v302, 112
    %v308 = vpop.permute.xlu0 %307
    %309 = vrot.lane.b32.xlu0 %v295, 112
    %v310 = vpop.permute.xlu0 %309
    %311 = vrot.lane.b32.xlu0 %v298, 112
    %v312 = vpop.permute.xlu0 %311
    %313 = vrot.lane.b32.xlu0 %v301, 112
    %v314 = vpop.permute.xlu0 %313
    %v315 = vsel %vm172, %v304, %v306
    %v316 = vsel %vm172, %v306, %v308
    %v317 = vsel %vm172, %v310, %v312
    %v318 = vsel %vm172, %v312, %v314
    %v325 = vadd.f32 %v274, %v315
    %v326 = vadd.f32 %v275, %v316
    %v327 = vadd.f32 %v276, %v308
    %v328 = vadd.f32 %v277, %v317
    %v329 = vadd.f32 %v278, %v318
    %v330 = vadd.f32 %v279, %v314
    %333 = vrot.lane.b32.xlu0 %v106, 111
    %v334 = vpop.permute.xlu0 %333
    %335 = vrot.lane.b32.xlu0 %v107, 111
    %v336 = vpop.permute.xlu0 %335
    %vm337 = vcmask 908288
    %v338 = vsel %vm337, %v334, %v336
    %v342 = vmul.f32 %v325, %v334
    %v343 = vmul.f32 %v326, %v338
    %v344 = vmul.f32 %v327, %v336
    %v345 = vmul.f32 %v328, %v334
    %v346 = vmul.f32 %v329, %v338
    %v347 = vmul.f32 %v330, %v336
    %v348 = vadd.f32 %v125, %v342
    %v349 = vadd.f32 %v125, %v343
    %v350 = vadd.f32 %v125, %v344
    %v351 = vadd.f32 %v130, %v345
    %v352 = vadd.f32 %v130, %v346
    %v353 = vadd.f32 %v130, %v347
    %s354 = sld [smem:[#allocation4 + $0x1]]
    %v355 = vstv %s354
    %v356 = vmul.f32 %v355, %v132
    %v357 = vmul.f32 %v355, %v133
    %v358 = vmul.f32 %v355, %v134
    %v359 = vmul.f32 %v355, %v135
    %v360 = vmul.f32 %v355, %v136
    %v361 = vmul.f32 %v355, %v137
    %s362 = sld [smem:[#allocation4 + $0x4]]
    %v363 = vstv %s362
    %v364 = vmul.f32 %v363, %v133
    %v365 = vmul.f32 %v363, %v134
    %v366 = vmul.f32 %v363, %v136
    %v367 = vmul.f32 %v363, %v137
    %372 = vrot.lane.b32.xlu0 %v364, 112
    %v373 = vpop.permute.xlu0 %372
    %374 = vrot.lane.b32.xlu0 %v365, 112
    %v375 = vpop.permute.xlu0 %374
    %376 = vrot.lane.b32.xlu0 %v366, 112
    %v377 = vpop.permute.xlu0 %376
    %378 = vrot.lane.b32.xlu0 %v367, 112
    %v379 = vpop.permute.xlu0 %378
    %v380 = vsel %vm172, %v373, %v375
    %v381 = vsel %vm172, %v377, %v379
    %v388 = vadd.f32 %v356, %v373
    %v389 = vadd.f32 %v357, %v380
    %v390 = vadd.f32 %v358, %v375
    %v391 = vadd.f32 %v359, %v377
    %v392 = vadd.f32 %v360, %v381
    %v393 = vadd.f32 %v361, %v379
    %s394 = sld [smem:[#allocation4 + $0x7]]
    %v395 = vstv %s394
    %v396 = vmul.f32 %v395, %v189
    %v397 = vmul.f32 %v395, %v190
    %v398 = vmul.f32 %v395, %v191
    %v399 = vmul.f32 %v395, %v192
    %v400 = vmul.f32 %v395, %v193
    %v401 = vmul.f32 %v395, %v194
    %408 = vrot.lane.b32.xlu0 %v396, 96
    %v409 = vpop.permute.xlu0 %408
    %410 = vrot.lane.b32.xlu0 %v397, 96
    %v411 = vpop.permute.xlu0 %410
    %412 = vrot.lane.b32.xlu0 %v398, 96
    %v413 = vpop.permute.xlu0 %412
    %414 = vrot.lane.b32.xlu0 %v399, 96
    %v415 = vpop.permute.xlu0 %414
    %416 = vrot.lane.b32.xlu0 %v400, 96
    %v417 = vpop.permute.xlu0 %416
    %418 = vrot.lane.b32.xlu0 %v401, 96
    %v419 = vpop.permute.xlu0 %418
    %v420 = vsel %vm221, %v409, %v411
    %v421 = vsel %vm221, %v411, %v413
    %v422 = vsel %vm221, %v415, %v417
    %v423 = vsel %vm221, %v417, %v419
    %v430 = vadd.f32 %v388, %v409
    %v431 = vadd.f32 %v389, %v420
    %v432 = vadd.f32 %v390, %v421
    %v433 = vadd.f32 %v391, %v415
    %v434 = vadd.f32 %v392, %v422
    %v435 = vadd.f32 %v393, %v423
    %s436 = sld [smem:[#allocation4 + $0xa]]
    %v437 = vstv %s436
    %v438 = vmul.f32 %v437, %v238
    %v439 = vmul.f32 %v437, %v239
    %v440 = vmul.f32 %v437, %v240
    %v441 = vmul.f32 %v437, %v241
    %v442 = vmul.f32 %v437, %v242
    %v443 = vmul.f32 %v437, %v243
    %v450 = vrot.slane %v438, 1
    %v451 = vrot.slane %v441, 1
    %v452 = vsel %vm258, %v450, %v451
    %v453 = vrot.slane %v439, 1
    %v454 = vrot.slane %v442, 1
    %v455 = vsel %vm258, %v453, %v454
    %v456 = vrot.slane %v440, 1
    %v457 = vrot.slane %v443, 1
    %v458 = vsel %vm258, %v456, %v457
    %v465 = vadd.f32 %v430, %v452
    %v466 = vadd.f32 %v431, %v455
    %v467 = vadd.f32 %v432, %v458
    %v468 = vadd.f32 %v433, %v451
    %v469 = vadd.f32 %v434, %v454
    %v470 = vadd.f32 %v435, %v457
    %477 = vrot.lane.b32.xlu0 %v465, 127
    %v478 = vpop.permute.xlu0 %477
    %479 = vrot.lane.b32.xlu0 %v466, 127
    %v480 = vpop.permute.xlu0 %479
    %481 = vrot.lane.b32.xlu0 %v467, 127
    %v482 = vpop.permute.xlu0 %481
    %483 = vrot.lane.b32.xlu0 %v468, 127
    %v484 = vpop.permute.xlu0 %483
    %485 = vrot.lane.b32.xlu0 %v469, 127
    %v486 = vpop.permute.xlu0 %485
    %487 = vrot.lane.b32.xlu0 %v470, 127
    %v488 = vpop.permute.xlu0 %487
    %vm489 = vcmask 1039360
    %v490 = vsel %vm489, %v478, %v480
    %v491 = vsel %vm489, %v480, %v482
    %v492 = vsel %vm489, %v484, %v486
    %v493 = vsel %vm489, %v486, %v488
    %v500 = vadd.f32 %v348, %v490
    %v501 = vadd.f32 %v349, %v491
    %v502 = vadd.f32 %v350, %v482
    %v503 = vadd.f32 %v351, %v492
    %v504 = vadd.f32 %v352, %v493
    %v505 = vadd.f32 %v353, %v488
    %s506 = sld [smem:[#allocation4 + $0x2]]
    %v507 = vstv %s506
    %v508 = vmul.f32 %v507, %v132
    %v509 = vmul.f32 %v507, %v133
    %v510 = vmul.f32 %v507, %v134
    %v511 = vmul.f32 %v507, %v135
    %v512 = vmul.f32 %v507, %v136
    %v513 = vmul.f32 %v507, %v137
    %s514 = sld [smem:[#allocation4 + $0x5]]
    %v515 = vstv %s514
    %v516 = vmul.f32 %v515, %v189
    %v517 = vmul.f32 %v515, %v190
    %v518 = vmul.f32 %v515, %v191
    %v519 = vmul.f32 %v515, %v192
    %v520 = vmul.f32 %v515, %v193
    %v521 = vmul.f32 %v515, %v194
    %528 = vrot.lane.b32.xlu0 %v516, 112
    %v529 = vpop.permute.xlu0 %528
    %530 = vrot.lane.b32.xlu0 %v517, 112
    %v531 = vpop.permute.xlu0 %530
    %532 = vrot.lane.b32.xlu0 %v518, 112
    %v533 = vpop.permute.xlu0 %532
    %534 = vrot.lane.b32.xlu0 %v519, 112
    %v535 = vpop.permute.xlu0 %534
    %536 = vrot.lane.b32.xlu0 %v520, 112
    %v537 = vpop.permute.xlu0 %536
    %538 = vrot.lane.b32.xlu0 %v521, 112
    %v539 = vpop.permute.xlu0 %538
    %v540 = vsel %vm172, %v529, %v531
    %v541 = vsel %vm172, %v531, %v533
    %v542 = vsel %vm172, %v535, %v537
    %v543 = vsel %vm172, %v537, %v539
    %v550 = vadd.f32 %v508, %v529
    %v551 = vadd.f32 %v509, %v540
    %v552 = vadd.f32 %v510, %v541
    %v553 = vadd.f32 %v511, %v535
    %v554 = vadd.f32 %v512, %v542
    %v555 = vadd.f32 %v513, %v543
    %s556 = sld [smem:[#allocation4 + $0x8]]
    %v557 = vstv %s556
    %v558 = vmul.f32 %v557, %v189
    %v559 = vmul.f32 %v557, %v190
    %v560 = vmul.f32 %v557, %v191
    %v561 = vmul.f32 %v557, %v192
    %v562 = vmul.f32 %v557, %v193
    %v563 = vmul.f32 %v557, %v194
    %570 = vrot.lane.b32.xlu0 %v558, 96
    %v571 = vpop.permute.xlu0 %570
    %572 = vrot.lane.b32.xlu0 %v559, 96
    %v573 = vpop.permute.xlu0 %572
    %574 = vrot.lane.b32.xlu0 %v560, 96
    %v575 = vpop.permute.xlu0 %574
    %576 = vrot.lane.b32.xlu0 %v561, 96
    %v577 = vpop.permute.xlu0 %576
    %578 = vrot.lane.b32.xlu0 %v562, 96
    %v579 = vpop.permute.xlu0 %578
    %580 = vrot.lane.b32.xlu0 %v563, 96
    %v581 = vpop.permute.xlu0 %580
    %v582 = vsel %vm221, %v571, %v573
    %v583 = vsel %vm221, %v573, %v575
    %v584 = vsel %vm221, %v577, %v579
    %v585 = vsel %vm221, %v579, %v581
    %v592 = vadd.f32 %v550, %v571
    %v593 = vadd.f32 %v551, %v582
    %v594 = vadd.f32 %v552, %v583
    %v595 = vadd.f32 %v553, %v577
    %v596 = vadd.f32 %v554, %v584
    %v597 = vadd.f32 %v555, %v585
    %s598 = sld [smem:[#allocation4 + $0xb]]
    %v599 = vstv %s598
    %v600 = vmul.f32 %v599, %v238
    %v601 = vmul.f32 %v599, %v239
    %v602 = vmul.f32 %v599, %v240
    %v603 = vmul.f32 %v599, %v241
    %v604 = vmul.f32 %v599, %v242
    %v605 = vmul.f32 %v599, %v243
    %v612 = vrot.slane %v600, 1
    %v613 = vrot.slane %v603, 1
    %v614 = vsel %vm258, %v612, %v613
    %v615 = vrot.slane %v601, 1
    %v616 = vrot.slane %v604, 1
    %v617 = vsel %vm258, %v615, %v616
    %v618 = vrot.slane %v602, 1
    %v619 = vrot.slane %v605, 1
    %v620 = vsel %vm258, %v618, %v619
    %v627 = vadd.f32 %v592, %v614
    %v628 = vadd.f32 %v593, %v617
    %v629 = vadd.f32 %v594, %v620
    %v630 = vadd.f32 %v595, %v613
    %v631 = vadd.f32 %v596, %v616
    %v632 = vadd.f32 %v597, %v619
    %635 = vrot.lane.b32.xlu0 %v118, 113
    %v636 = vpop.permute.xlu0 %635
    %637 = vrot.lane.b32.xlu0 %v119, 113
    %v638 = vpop.permute.xlu0 %637
    %vm639 = vcmask 924672
    %v640 = vsel %vm639, %v636, %v638
    %v644 = vmul.f32 %v627, %v636
    %v645 = vmul.f32 %v628, %v640
    %v646 = vmul.f32 %v629, %v638
    %v647 = vmul.f32 %v630, %v636
    %v648 = vmul.f32 %v631, %v640
    %v649 = vmul.f32 %v632, %v638
    %656 = vrot.lane.b32.xlu0 %v644, 126
    %v657 = vpop.permute.xlu0 %656
    %658 = vrot.lane.b32.xlu0 %v645, 126
    %v659 = vpop.permute.xlu0 %658
    %660 = vrot.lane.b32.xlu0 %v646, 126
    %v661 = vpop.permute.xlu0 %660
    %662 = vrot.lane.b32.xlu0 %v647, 126
    %v663 = vpop.permute.xlu0 %662
    %664 = vrot.lane.b32.xlu0 %v648, 126
    %v665 = vpop.permute.xlu0 %664
    %666 = vrot.lane.b32.xlu0 %v649, 126
    %v667 = vpop.permute.xlu0 %666
    %vm668 = vcmask 1031168
    %v669 = vsel %vm668, %v657, %v659
    %v670 = vsel %vm668, %v659, %v661
    %v671 = vsel %vm668, %v663, %v665
    %v672 = vsel %vm668, %v665, %v667
    %v679 = vadd.f32 %v500, %v669
    %v680 = vadd.f32 %v501, %v670
    %v681 = vadd.f32 %v502, %v661
    %v682 = vadd.f32 %v503, %v671
    %v683 = vadd.f32 %v504, %v672
    %v684 = vadd.f32 %v505, %v667
    %v688 = vcombine.low %v679, %v680
    %689 = vrot.lane.b32.xlu0 %v688, 17
    %v690 = vpop.permute.xlu0 %689
    %691 = vrot.lane.b32.xlu0 %v681, 17
    %v692 = vpop.permute.xlu0 %691
    %v693 = vrot.slane %v690, 4
    %v694 = vrot.slane %v692, 4
    %vm695 = vcmask 1043456
    %v696 = vsel %vm695, %v693, %v694
    %vm697 = vcmask 138240
    %v698 = vsel %vm697, %v690, %v696
    %700 = vst [vmem:[#allocation5] sm:$0xff] %v698
    %v704 = vcombine.high %v679, %v680
    %v705 = vcombine.high %v681, %v681
    %v706 = vcombine.low %v682, %v683
    %vm707 = vcmask 1042432
    %vm708 = vcmask 1046532
    %vm709 = vmor %vm707, %vm708
    %v710 = vrot.slane %v704, 5
    %v711 = vrot.slane %v710, 4
    %v712 = vrot.slane %v706, 5
    %v713 = vsel %vm709, %v711, %v712
    %v714 = vrot.slane %v705, 5
    %v715 = vrot.slane %v714, 4
    %v716 = vrot.slane %v684, 5
    %v717 = vsel %vm709, %v715, %v716
    %718 = vrot.lane.b32.xlu0 %v713, 17
    %v719 = vpop.permute.xlu0 %718
    %720 = vrot.lane.b32.xlu0 %v717, 17
    %v721 = vpop.permute.xlu0 %720
    %v722 = vrot.slane %v719, 4
    %v723 = vrot.slane %v721, 4
    %v724 = vsel %vm695, %v722, %v723
    %v725 = vsel %vm697, %v719, %v724
    %s727 = scalar_lea.vmem [#allocation5], 8
    %728 = vst [vmem:[%s727] sm:$0xff] %v725
    // Predicated region
    $region10: #{tpu_custom_call.1} parent=1 // pred_check
      _
    $region11: #{tpu_custom_call.1} parent=1 // pred_check_branch
      %730 = sbr.rel (0) target = $region13
    $region12: #{tpu_custom_call.1} parent=1 // pred_region
      %s732 = ssub.s32 256, 256
      %733 = vsyncadd [#allocation6], %s732
      %s734 = sshll.u32 [#allocation5], 4
      %s735 = int_to_ptr.vmem [resolvable:$true] %s734
      %740 = dma.vmem_to_hbm [thread:$0]  %s735, 256, %s3, [#allocation6], 128, 128, 8
    $region13: #{tpu_custom_call.1} parent=1 // pred_fallthru
      _
    // Predicated region
    $region14: #{tpu_custom_call.1} parent=1 // pred_check
      _
    $region15: #{tpu_custom_call.1} parent=1 // pred_check_branch
      %742 = sbr.rel (0) target = $region17
    $region16: #{tpu_custom_call.1} parent=1 // pred_region
      %743 = dma.done [#allocation6], 256
    $region17: #{tpu_custom_call.1} parent=1 // pred_fallthru
      _
    %744 = vsyncpa [#allocation6], 1

</llo_original>
